<compile_context>
chip_gen: v7x
topology: tpu7x:2x2x1
jax: 0.10.0
libtpu: 0.0.40
codegen_flags: <defaults>
</compile_context>

<pallas_src>
import jax
import jax.numpy as jnp
from jax import lax
from jax.experimental import pallas as pl
from jax.experimental.pallas import tpu as pltpu

# ----------------------------- configuration ------------------------------
OBS_DIM = 9                               # data['obs'][:, 18:27] -> 9 features
ACT_DIM = 7
INPUT_DIM = ACT_DIM + OBS_DIM             # D = 16
T_HORIZON = 8                             # planning horizon T
SAMPLING_STEPS = 5
HIDDEN = 32
BATCH = 2

TD = T_HORIZON * INPUT_DIM                # 128  (lane-dense state width)
TH = T_HORIZON * HIDDEN                   # 256  (lane-dense hidden width)
COND_ROWS = 2 * OBS_DIM + 1               # 19   [obs(9), goal(9), return(1)]
LANE_SHIFT = INPUT_DIM.bit_length() - 1   # 4    (D == 16 is a power of two)
assert INPUT_DIM == (1 << LANE_SHIFT)
assert T_HORIZON > 1                      # first/last inpaint rows must differ

# packed f32 parameter buffer: every section starts on an 8-row boundary
ROW_WC = 0       # (COND_ROWS, TH)  [wc_obs; wc_goal; wc_ret + b1] tiled over T
ROW_WCT = 24     # (1, TH)          dt * wc_t, tiled over T
ROW_P = 32       # (COND_ROWS, TD)  inpaint placement matrix
ROW_B2 = 56      # (1, TD)          dt * b2, tiled over T
ROW_OMEAN = 64   # (1, TD)          out_mean, tiled over T
ROW_OSTD = 72    # (1, TD)          out_std, tiled over T
ROW_IMEAN = 80   # (1, COND_ROWS)   [in_mean, in_mean, 0]
ROW_ISTD = 88    # (1, COND_ROWS)   [1/in_std, 1/in_std, 1]   (reciprocal!)
PF32_ROWS = 96
WBF16_ROWS = TD + TH                      # 384 rows of bf16 block-diag weights


# ------------------------------- kernel -----------------------------------
def policy_forward_kernel(x_ref, og_ref, w_ref, p_ref, o_ref):
    B, T, D, A = BATCH, T_HORIZON, INPUT_DIM, ACT_DIM

    # ---- pre-packed bf16 MXU weights (dt already folded into layer 2) ----
    wx_big = w_ref[0:TD, :]                    # (128, 256) bf16, block-diag wx
    w2dt_big = w_ref[TD:TD + TH, 0:TD]         # (256, 128) bf16, block-diag dt*w2

    # ---- packed f32 params, 8-row-aligned sections (no sublane rotates) ----
    wc_big = p_ref[ROW_WC:ROW_WC + COND_ROWS, :]            # (19, 256)
    step_inc = p_ref[ROW_WCT:ROW_WCT + 1, :]                # (1, 256) dt*wc_t
    place = p_ref[ROW_P:ROW_P + COND_ROWS, 0:TD]            # (19, 128)
    b2dt = p_ref[ROW_B2:ROW_B2 + 1, 0:TD]                   # (1, 128) dt*b2
    out_mean = p_ref[ROW_OMEAN:ROW_OMEAN + 1, 0:TD]         # (1, 128)
    out_std = p_ref[ROW_OSTD:ROW_OSTD + 1, 0:TD]            # (1, 128)
    in_mean = p_ref[ROW_IMEAN:ROW_IMEAN + 1, 0:COND_ROWS]   # (1, 19)
    in_invstd = p_ref[ROW_ISTD:ROW_ISTD + 1, 0:COND_ROWS]   # (1, 19)

    # ---- normalizer.scale_input on merged [obs, goal, ret=1] (mul by 1/std) ----
    og = (og_ref[...] - in_mean) * in_invstd                # (B, 19)

    # ---- hoisted conditioning + inpaint values (tiny prologue matmuls) ----
    # cond[b, t*H + j] = obs@wc_obs + goal@wc_goal + wc_ret + b1   (same per t)
    cond = jnp.dot(og, wc_big, preferred_element_type=jnp.float32)      # (B, 256)
    # inpaint_vals places scaled obs at lanes [A, D) of t=0 and scaled goal
    # at lanes [A, D) of t=T-1; zeros elsewhere (never selected).
    inpaint_vals = jnp.dot(og, place, preferred_element_type=jnp.float32)  # (B, 128)

    # loop-invariant broadcasts, materialized once (JAX does not CSE these)
    step_inc_full = jnp.broadcast_to(step_inc, (B, TH))
    b2dt_full = jnp.broadcast_to(b2dt, (B, TD))

    # single fused inpaint mask on the lane-dense layout
    cols = lax.broadcasted_iota(jnp.int32, (B, TD), 1)
    feat = jnp.bitwise_and(cols, D - 1)        # col % D
    tpos = jnp.right_shift(cols, LANE_SHIFT)   # col // D
    inpaint_mask = (feat >= A) & ((tpos == 0) | (tpos == T - 1))

    # ---- Euler integration, fully unrolled (f32 state, bf16 MXU operands) ----
    x = x_ref[...]                                           # (B, 128) f32
    for i in range(SAMPLING_STEPS):
        x = jnp.where(inpaint_mask, inpaint_vals, x)         # fused inpaint
        h = jnp.dot(x.astype(jnp.bfloat16), wx_big,
                    preferred_element_type=jnp.float32) + cond
        h = jnp.tanh(h)
        x = x + jnp.dot(h.astype(jnp.bfloat16), w2dt_big,
                        preferred_element_type=jnp.float32) + b2dt_full
        if i + 1 < SAMPLING_STEPS:
            cond = cond + step_inc_full                      # t += dt (folded)

    # ---- final inpaint, normalizer.clip, inverse_scale_output ----
    x = jnp.where(inpaint_mask, inpaint_vals, x)
    x = jnp.clip(x, -1.0, 1.0)
    o_ref[...] = x * out_std + out_mean


# ------------------------------- params -----------------------------------
def make_params(key):
    """Raw model/normalizer params + one-time packed kernel buffers."""
    ks = jax.random.split(key, 8)
    wx = 0.1 * jax.random.normal(ks[0], (INPUT_DIM, HIDDEN), jnp.float32)
    wc = 0.1 * jax.random.normal(ks[1], (2 * OBS_DIM + 2, HIDDEN), jnp.float32)
    b1 = 0.1 * jax.random.normal(ks[2], (1, HIDDEN), jnp.float32)
    w2 = 0.1 * jax.random.normal(ks[3], (HIDDEN, INPUT_DIM), jnp.float32)
    b2 = 0.1 * jax.random.normal(ks[4], (1, INPUT_DIM), jnp.float32)
    in_mean = 0.1 * jax.random.normal(ks[5], (OBS_DIM,), jnp.float32)
    in_std = 0.5 + jax.random.uniform(ks[6], (OBS_DIM,), jnp.float32)
    out_mean = jnp.zeros((1, INPUT_DIM), jnp.float32)
    out_std = 0.5 + jax.random.uniform(ks[7], (1, INPUT_DIM), jnp.float32)

    dt = 1.0 / SAMPLING_STEPS

    # -- bf16 block-diagonal MXU weights, dt folded into layer 2 (one-time) --
    eye_t = jnp.eye(T_HORIZON, dtype=jnp.float32)
    wx_big = jnp.kron(eye_t, wx)               # (TD, TH)
    w2dt_big = jnp.kron(eye_t, dt * w2)        # (TH, TD)
    w_bf16 = jnp.zeros((WBF16_ROWS, TH), jnp.float32)
    w_bf16 = w_bf16.at[0:TD, :].set(wx_big)
    w_bf16 = w_bf16.at[TD:, 0:TD].set(w2dt_big)
    w_bf16 = w_bf16.astype(jnp.bfloat16)

    # -- f32 packed params; sections 8-row aligned --
    wc_block = jnp.concatenate(
        [wc[0:2 * OBS_DIM, :], wc[2 * OBS_DIM:2 * OBS_DIM + 1, :] + b1], axis=0)
    wc_big = jnp.tile(wc_block, (1, T_HORIZON))                       # (19, TH)
    wct_dt = jnp.tile(dt * wc[2 * OBS_DIM + 1:2 * OBS_DIM + 2, :],
                      (1, T_HORIZON))                                  # (1, TH)
    place = jnp.zeros((COND_ROWS, TD), jnp.float32)
    idx = jnp.arange(OBS_DIM)
    place = place.at[idx, ACT_DIM + idx].set(1.0)                      # obs -> t=0
    place = place.at[OBS_DIM + idx,
                     (T_HORIZON - 1) * INPUT_DIM + ACT_DIM + idx].set(1.0)  # goal
    b2dt = jnp.tile(dt * b2, (1, T_HORIZON))                           # (1, TD)
    omean = jnp.tile(out_mean, (1, T_HORIZON))
    ostd = jnp.tile(out_std, (1, T_HORIZON))
    imean = jnp.concatenate([in_mean, in_mean,
                             jnp.zeros((1,), jnp.float32)])[None, :]   # (1, 19)
    iinv = jnp.concatenate([1.0 / in_std, 1.0 / in_std,
                            jnp.ones((1,), jnp.float32)])[None, :]     # (1, 19)

    p_f32 = jnp.zeros((PF32_ROWS, TH), jnp.float32)
    p_f32 = p_f32.at[ROW_WC:ROW_WC + COND_ROWS, :].set(wc_big)
    p_f32 = p_f32.at[ROW_WCT:ROW_WCT + 1, :].set(wct_dt)
    p_f32 = p_f32.at[ROW_P:ROW_P + COND_ROWS, 0:TD].set(place)
    p_f32 = p_f32.at[ROW_B2:ROW_B2 + 1, 0:TD].set(b2dt)
    p_f32 = p_f32.at[ROW_OMEAN:ROW_OMEAN + 1, 0:TD].set(omean)
    p_f32 = p_f32.at[ROW_OSTD:ROW_OSTD + 1, 0:TD].set(ostd)
    p_f32 = p_f32.at[ROW_IMEAN:ROW_IMEAN + 1, 0:COND_ROWS].set(imean)
    p_f32 = p_f32.at[ROW_ISTD:ROW_ISTD + 1, 0:COND_ROWS].set(iinv)

    raw = dict(wx=wx, wc=wc, b1=b1, w2=w2, b2=b2, in_mean=in_mean,
               in_std=in_std, out_mean=out_mean, out_std=out_std)
    return w_bf16, p_f32, raw


# ---------------------------- pure-JAX reference ---------------------------
def policy_forward_ref(x0, obs_raw, goal_raw, raw):
    """f32 reference of Policy.process + Policy.forward (flow path)."""
    dt = 1.0 / SAMPLING_STEPS
    obs = (obs_raw - raw["in_mean"]) / raw["in_std"]
    goal = (goal_raw - raw["in_mean"]) / raw["in_std"]
    ret = jnp.ones((BATCH, 1), jnp.float32)

    def inpaint(x):
        x = x.at[:, 0, ACT_DIM:].set(obs)
        x = x.at[:, -1, ACT_DIM:].set(goal)
        return x

    x = x0
    for i in range(SAMPLING_STEPS):
        x = inpaint(x)
        t = jnp.full((BATCH, 1), i * dt, jnp.float32)
        cond = jnp.concatenate([obs, goal, ret, t], axis=-1)          # (B, 20)
        emb = cond @ raw["wc"] + raw["b1"]                            # (B, H)
        h = jnp.tanh(x @ raw["wx"] + emb[:, None, :])                 # (B, T, H)
        x = x + dt * (h @ raw["w2"] + raw["b2"])
    x = inpaint(x)
    x = jnp.clip(x, -1.0, 1.0)
    return x * raw["out_std"] + raw["out_mean"]


# ------------------------------- wrapper -----------------------------------
@jax.jit
def policy_forward(x0, og_ext, w_bf16, p_f32):
    """Equivalent of Policy.process + Policy.forward (inference path)."""
    vmem = pl.BlockSpec(memory_space=pltpu.MemorySpace.VMEM)
    out = pl.pallas_call(
        policy_forward_kernel,
        out_shape=jax.ShapeDtypeStruct((BATCH, TD), jnp.float32),
        in_specs=[vmem] * 4,
        out_specs=vmem,
    )(x0.reshape(BATCH, TD), og_ext, w_bf16, p_f32)
    return out.reshape(BATCH, T_HORIZON, INPUT_DIM)


# --------------------------------- main -------------------------------------
if __name__ == "__main__":
    key = jax.random.PRNGKey(0)
    k_noise, k_obs, k_goal, k_params = jax.random.split(key, 4)

    w_bf16, p_f32, raw = make_params(k_params)

    # x = torch.randn((bsz, T, input_dim)) -> deterministic JAX noise
    x0 = jax.random.normal(k_noise, (BATCH, T_HORIZON, INPUT_DIM), jnp.float32)
    obs_raw = jax.random.normal(k_obs, (BATCH, OBS_DIM), jnp.float32)
    goal_raw = jax.random.normal(k_goal, (BATCH, OBS_DIM), jnp.float32)
    # Caller-side merged conditioning input [obs, goal, return=1] -> one DMA.
    og_ext = jnp.concatenate(
        [obs_raw, goal_raw, jnp.ones((BATCH, 1), jnp.float32)], axis=-1)

    traj = policy_forward(x0, og_ext, w_bf16, p_f32)
    jax.block_until_ready(traj)

    ref = policy_forward_ref(x0, obs_raw, goal_raw, raw)
    assert traj.shape == (BATCH, T_HORIZON, INPUT_DIM)
    assert bool(jnp.all(jnp.isfinite(traj)))
    max_err = float(jnp.max(jnp.abs(traj - ref)))
    assert max_err < 5e-2, f"mismatch vs f32 reference: {max_err}"
    print("KERNEL_OK")
</pallas_src>

<mosaic_0001>
module attributes {stable_mosaic.version = 11 : i64} {
  func.func @policy_forward_kernel(%arg0: memref<2x128xf32, #tpu.memory_space<vmem>>, %arg1: memref<2x19xf32, #tpu.memory_space<vmem>>, %arg2: memref<384x256xbf16, #tpu.memory_space<vmem>>, %arg3: memref<96x256xf32, #tpu.memory_space<vmem>>, %arg4: memref<2x128xf32, #tpu.memory_space<vmem>>) attributes {dimension_semantics = [], scalar_prefetch = 0 : i64, scratch_operands = 0 : i64, tpu.core_type = #tpu.core_type<tc>} {
    %c0 = arith.constant 0 : index
    %c0_0 = arith.constant 0 : index
    %0 = vector.load %arg2[%c0, %c0_0] : memref<384x256xbf16, #tpu.memory_space<vmem>>, vector<128x256xbf16>
    %c128 = arith.constant 128 : index
    %c0_1 = arith.constant 0 : index
    %1 = vector.load %arg2[%c128, %c0_1] : memref<384x256xbf16, #tpu.memory_space<vmem>>, vector<256x128xbf16>
    %c0_2 = arith.constant 0 : index
    %c0_3 = arith.constant 0 : index
    %2 = vector.load %arg3[%c0_2, %c0_3] : memref<96x256xf32, #tpu.memory_space<vmem>>, vector<19x256xf32>
    %c24 = arith.constant 24 : index
    %c0_4 = arith.constant 0 : index
    %3 = vector.load %arg3[%c24, %c0_4] : memref<96x256xf32, #tpu.memory_space<vmem>>, vector<1x256xf32>
    %c32 = arith.constant 32 : index
    %c0_5 = arith.constant 0 : index
    %4 = vector.load %arg3[%c32, %c0_5] : memref<96x256xf32, #tpu.memory_space<vmem>>, vector<19x128xf32>
    %c56 = arith.constant 56 : index
    %c0_6 = arith.constant 0 : index
    %5 = vector.load %arg3[%c56, %c0_6] : memref<96x256xf32, #tpu.memory_space<vmem>>, vector<1x128xf32>
    %c64 = arith.constant 64 : index
    %c0_7 = arith.constant 0 : index
    %6 = vector.load %arg3[%c64, %c0_7] : memref<96x256xf32, #tpu.memory_space<vmem>>, vector<1x128xf32>
    %c72 = arith.constant 72 : index
    %c0_8 = arith.constant 0 : index
    %7 = vector.load %arg3[%c72, %c0_8] : memref<96x256xf32, #tpu.memory_space<vmem>>, vector<1x128xf32>
    %c80 = arith.constant 80 : index
    %c0_9 = arith.constant 0 : index
    %8 = vector.load %arg3[%c80, %c0_9] : memref<96x256xf32, #tpu.memory_space<vmem>>, vector<1x19xf32>
    %c88 = arith.constant 88 : index
    %c0_10 = arith.constant 0 : index
    %9 = vector.load %arg3[%c88, %c0_10] : memref<96x256xf32, #tpu.memory_space<vmem>>, vector<1x19xf32>
    %c0_11 = arith.constant 0 : index
    %c0_12 = arith.constant 0 : index
    %10 = vector.load %arg1[%c0_11, %c0_12] : memref<2x19xf32, #tpu.memory_space<vmem>>, vector<2x19xf32>
    %11 = vector.broadcast %8 : vector<1x19xf32> to vector<2x19xf32>
    %12 = arith.subf %10, %11 : vector<2x19xf32>
    %13 = vector.broadcast %9 : vector<1x19xf32> to vector<2x19xf32>
    %14 = arith.mulf %12, %13 : vector<2x19xf32>
    %cst = arith.constant dense<0.000000e+00> : vector<2x256xf32>
    %15 = tpu.matmul %14, %2, %cst {dimension_numbers = #tpu.dot_dimension_numbers<[1], [0], [0], [1], [0, 0, 1, 1], [], []>} : vector<2x19xf32>, vector<19x256xf32>, vector<2x256xf32> -> vector<2x256xf32>
    %cst_13 = arith.constant dense<0.000000e+00> : vector<2x128xf32>
    %16 = tpu.matmul %14, %4, %cst_13 {dimension_numbers = #tpu.dot_dimension_numbers<[1], [0], [0], [1], [0, 0, 1, 1], [], []>} : vector<2x19xf32>, vector<19x128xf32>, vector<2x128xf32> -> vector<2x128xf32>
    %17 = vector.shape_cast %3 : vector<1x256xf32> to vector<1x256xf32>
    %18 = vector.broadcast %17 : vector<1x256xf32> to vector<2x256xf32>
    %19 = vector.shape_cast %5 : vector<1x128xf32> to vector<1x128xf32>
    %20 = vector.broadcast %19 : vector<1x128xf32> to vector<2x128xf32>
    %21 = tpu.iota {dimensions = array<i32: 1>} : vector<2x128xi32>
    %c15_i32 = arith.constant 15 : i32
    %22 = vector.broadcast %c15_i32 : i32 to vector<2x128xi32>
    %23 = arith.andi %21, %22 : vector<2x128xi32>
    %c4_i32 = arith.constant 4 : i32
    %24 = vector.broadcast %c4_i32 : i32 to vector<2x128xi32>
    %25 = arith.shrsi %21, %24 : vector<2x128xi32>
    %c7_i32 = arith.constant 7 : i32
    %26 = vector.broadcast %c7_i32 : i32 to vector<2x128xi32>
    %27 = arith.cmpi sge, %23, %26 : vector<2x128xi32>
    %c0_i32 = arith.constant 0 : i32
    %28 = vector.broadcast %c0_i32 : i32 to vector<2x128xi32>
    %29 = arith.cmpi eq, %25, %28 : vector<2x128xi32>
    %c7_i32_14 = arith.constant 7 : i32
    %30 = vector.broadcast %c7_i32_14 : i32 to vector<2x128xi32>
    %31 = arith.cmpi eq, %25, %30 : vector<2x128xi32>
    %32 = arith.ori %29, %31 : vector<2x128xi1>
    %33 = arith.andi %27, %32 : vector<2x128xi1>
    %c0_15 = arith.constant 0 : index
    %c0_16 = arith.constant 0 : index
    %34 = vector.load %arg0[%c0_15, %c0_16] : memref<2x128xf32, #tpu.memory_space<vmem>>, vector<2x128xf32>
    %35 = arith.select %33, %16, %34 : vector<2x128xi1>, vector<2x128xf32>
    %36 = arith.truncf %35 : vector<2x128xf32> to vector<2x128xbf16>
    %cst_17 = arith.constant dense<0.000000e+00> : vector<2x256xf32>
    %37 = tpu.matmul %36, %0, %cst_17 {dimension_numbers = #tpu.dot_dimension_numbers<[1], [0], [0], [1], [0, 0, 1, 1], [], []>} : vector<2x128xbf16>, vector<128x256xbf16>, vector<2x256xf32> -> vector<2x256xf32>
    %38 = arith.addf %37, %15 : vector<2x256xf32>
    %39 = math.tanh %38 : vector<2x256xf32>
    %40 = arith.truncf %39 : vector<2x256xf32> to vector<2x256xbf16>
    %cst_18 = arith.constant dense<0.000000e+00> : vector<2x128xf32>
    %41 = tpu.matmul %40, %1, %cst_18 {dimension_numbers = #tpu.dot_dimension_numbers<[1], [0], [0], [1], [0, 0, 1, 1], [], []>} : vector<2x256xbf16>, vector<256x128xbf16>, vector<2x128xf32> -> vector<2x128xf32>
    %42 = arith.addf %35, %41 : vector<2x128xf32>
    %43 = arith.addf %42, %20 : vector<2x128xf32>
    %44 = arith.addf %15, %18 : vector<2x256xf32>
    %45 = arith.select %33, %16, %43 : vector<2x128xi1>, vector<2x128xf32>
    %46 = arith.truncf %45 : vector<2x128xf32> to vector<2x128xbf16>
    %cst_19 = arith.constant dense<0.000000e+00> : vector<2x256xf32>
    %47 = tpu.matmul %46, %0, %cst_19 {dimension_numbers = #tpu.dot_dimension_numbers<[1], [0], [0], [1], [0, 0, 1, 1], [], []>} : vector<2x128xbf16>, vector<128x256xbf16>, vector<2x256xf32> -> vector<2x256xf32>
    %48 = arith.addf %47, %44 : vector<2x256xf32>
    %49 = math.tanh %48 : vector<2x256xf32>
    %50 = arith.truncf %49 : vector<2x256xf32> to vector<2x256xbf16>
    %cst_20 = arith.constant dense<0.000000e+00> : vector<2x128xf32>
    %51 = tpu.matmul %50, %1, %cst_20 {dimension_numbers = #tpu.dot_dimension_numbers<[1], [0], [0], [1], [0, 0, 1, 1], [], []>} : vector<2x256xbf16>, vector<256x128xbf16>, vector<2x128xf32> -> vector<2x128xf32>
    %52 = arith.addf %45, %51 : vector<2x128xf32>
    %53 = arith.addf %52, %20 : vector<2x128xf32>
    %54 = arith.addf %44, %18 : vector<2x256xf32>
    %55 = arith.select %33, %16, %53 : vector<2x128xi1>, vector<2x128xf32>
    %56 = arith.truncf %55 : vector<2x128xf32> to vector<2x128xbf16>
    %cst_21 = arith.constant dense<0.000000e+00> : vector<2x256xf32>
    %57 = tpu.matmul %56, %0, %cst_21 {dimension_numbers = #tpu.dot_dimension_numbers<[1], [0], [0], [1], [0, 0, 1, 1], [], []>} : vector<2x128xbf16>, vector<128x256xbf16>, vector<2x256xf32> -> vector<2x256xf32>
    %58 = arith.addf %57, %54 : vector<2x256xf32>
    %59 = math.tanh %58 : vector<2x256xf32>
    %60 = arith.truncf %59 : vector<2x256xf32> to vector<2x256xbf16>
    %cst_22 = arith.constant dense<0.000000e+00> : vector<2x128xf32>
    %61 = tpu.matmul %60, %1, %cst_22 {dimension_numbers = #tpu.dot_dimension_numbers<[1], [0], [0], [1], [0, 0, 1, 1], [], []>} : vector<2x256xbf16>, vector<256x128xbf16>, vector<2x128xf32> -> vector<2x128xf32>
    %62 = arith.addf %55, %61 : vector<2x128xf32>
    %63 = arith.addf %62, %20 : vector<2x128xf32>
    %64 = arith.addf %54, %18 : vector<2x256xf32>
    %65 = arith.select %33, %16, %63 : vector<2x128xi1>, vector<2x128xf32>
    %66 = arith.truncf %65 : vector<2x128xf32> to vector<2x128xbf16>
    %cst_23 = arith.constant dense<0.000000e+00> : vector<2x256xf32>
    %67 = tpu.matmul %66, %0, %cst_23 {dimension_numbers = #tpu.dot_dimension_numbers<[1], [0], [0], [1], [0, 0, 1, 1], [], []>} : vector<2x128xbf16>, vector<128x256xbf16>, vector<2x256xf32> -> vector<2x256xf32>
    %68 = arith.addf %67, %64 : vector<2x256xf32>
    %69 = math.tanh %68 : vector<2x256xf32>
    %70 = arith.truncf %69 : vector<2x256xf32> to vector<2x256xbf16>
    %cst_24 = arith.constant dense<0.000000e+00> : vector<2x128xf32>
    %71 = tpu.matmul %70, %1, %cst_24 {dimension_numbers = #tpu.dot_dimension_numbers<[1], [0], [0], [1], [0, 0, 1, 1], [], []>} : vector<2x256xbf16>, vector<256x128xbf16>, vector<2x128xf32> -> vector<2x128xf32>
    %72 = arith.addf %65, %71 : vector<2x128xf32>
    %73 = arith.addf %72, %20 : vector<2x128xf32>
    %74 = arith.addf %64, %18 : vector<2x256xf32>
    %75 = arith.select %33, %16, %73 : vector<2x128xi1>, vector<2x128xf32>
    %76 = arith.truncf %75 : vector<2x128xf32> to vector<2x128xbf16>
    %cst_25 = arith.constant dense<0.000000e+00> : vector<2x256xf32>
    %77 = tpu.matmul %76, %0, %cst_25 {dimension_numbers = #tpu.dot_dimension_numbers<[1], [0], [0], [1], [0, 0, 1, 1], [], []>} : vector<2x128xbf16>, vector<128x256xbf16>, vector<2x256xf32> -> vector<2x256xf32>
    %78 = arith.addf %77, %74 : vector<2x256xf32>
    %79 = math.tanh %78 : vector<2x256xf32>
    %80 = arith.truncf %79 : vector<2x256xf32> to vector<2x256xbf16>
    %cst_26 = arith.constant dense<0.000000e+00> : vector<2x128xf32>
    %81 = tpu.matmul %80, %1, %cst_26 {dimension_numbers = #tpu.dot_dimension_numbers<[1], [0], [0], [1], [0, 0, 1, 1], [], []>} : vector<2x256xbf16>, vector<256x128xbf16>, vector<2x128xf32> -> vector<2x128xf32>
    %82 = arith.addf %75, %81 : vector<2x128xf32>
    %83 = arith.addf %82, %20 : vector<2x128xf32>
    %84 = arith.select %33, %16, %83 : vector<2x128xi1>, vector<2x128xf32>
    %cst_27 = arith.constant -1.000000e+00 : f32
    %cst_28 = arith.constant 1.000000e+00 : f32
    %85 = vector.broadcast %cst_27 : f32 to vector<2x128xf32>
    %86 = arith.maximumf %85, %84 : vector<2x128xf32>
    %87 = vector.broadcast %cst_28 : f32 to vector<2x128xf32>
    %88 = arith.minimumf %87, %86 : vector<2x128xf32>
    %89 = vector.broadcast %7 : vector<1x128xf32> to vector<2x128xf32>
    %90 = arith.mulf %88, %89 : vector<2x128xf32>
    %91 = vector.broadcast %6 : vector<1x128xf32> to vector<2x128xf32>
    %92 = arith.addf %90, %91 : vector<2x128xf32>
    %c0_29 = arith.constant 0 : index
    %c0_30 = arith.constant 0 : index
    %93 = vector.load %arg4[%c0_29, %c0_30] : memref<2x128xf32, #tpu.memory_space<vmem>>, vector<2x128xf32>
    tpu.vector_store %arg4[%c0_29, %c0_30], %92 {strides = array<i32>} : memref<2x128xf32, #tpu.memory_space<vmem>>, vector<2x128xf32>,
    return
  }
}

</mosaic_0001>

<llo_original>
// kernel: policy_forward.1
$region0: #{policy_forward.1}
  #allocation0 [shape = 'u32[]', space=smem, size = 0x4, offset = 0x4, fixed_abs, tag = 'smem constant byte address 0x4 - core index']
  #allocation1 [shape = 'u32[144,128]{1,0:T(1,128)}', space=vmem, size = 0x12000, scoped, tag = 'internal scratch']
  %s0 = inlined_call_operand.vmem [shape: f32[2,128], index: 0, kind: input, shape index: {}]
  %s1 = inlined_call_operand.vmem [shape: f32[2,19], index: 1, kind: input, shape index: {}]
  %s2 = inlined_call_operand.hbm [shape: bf16[384,256], index: 2, kind: input, shape index: {}]
  %s3 = inlined_call_operand.hbm [shape: f32[96,256], index: 3, kind: input, shape index: {}]
  %s4 = inlined_call_operand.vmem [shape: f32[2,128], index: 4, kind: output, shape index: {}]
  %s5 = sld [smem:[#allocation0]]
  $region34: #{policy_forward.1} parent=0
    _
  %s7 = ssub.s32 1, %s5
  %s8 = scalar_select 0, %s7, %s5
  $region1: #{policy_forward.1} parent=0
    #allocation2 [shape = 'u8[196608]{0}', space=vmem, size = 0x30000, scoped, tag = 'input window, operand 2, single buffered']
    #allocation3 [shape = 's32[1]{0}', space=sflag, size = 0x4, scoped, tag = 'scoped memory for policy_forward.1']
    #allocation4 [shape = 'u8[98304]{0}', space=vmem, size = 0x18000, scoped, tag = 'input window, operand 3, single buffered']
    #allocation5 [shape = 's32[1]{0}', space=sflag, size = 0x4, scoped, tag = 'scoped memory for policy_forward.1']
    %9 = vsyncpa [#allocation3], 0
    %10 = vsyncpa [#allocation5], 0
    // Predicated region
    $region2: #{policy_forward.1} parent=1 // pred_check
      _
    $region3: #{policy_forward.1} parent=1 // pred_check_branch
      %12 = sbr.rel (0) target = $region5
    $region4: #{policy_forward.1} parent=1 // pred_region
      _
    $region5: #{policy_forward.1} parent=1 // pred_fallthru
      _
    // Predicated region
    $region6: #{policy_forward.1} parent=1 // pred_check
      _
    $region7: #{policy_forward.1} parent=1 // pred_check_branch
      %14 = sbr.rel (0) target = $region9
    $region8: #{policy_forward.1} parent=1 // pred_region
      _
    $region9: #{policy_forward.1} parent=1 // pred_fallthru
      _
    // Predicated region
    $region10: #{policy_forward.1} parent=1 // pred_check
      _
    $region11: #{policy_forward.1} parent=1 // pred_check_branch
      %16 = sbr.rel (0) target = $region13
    $region12: #{policy_forward.1} parent=1 // pred_region
      %s18 = ssub.s32 6144, 6144
      %19 = vsyncadd [#allocation3], %s18
      %s20 = sshll.u32 [#allocation2], 4
      %s21 = int_to_ptr.vmem [resolvable:$true] %s20
      %26 = dma.hbm_to_vmem [thread:$0]  %s2, 6144, %s21, [#allocation3], 128, 128, 8
    $region13: #{policy_forward.1} parent=1 // pred_fallthru
      _
    // Predicated region
    $region14: #{policy_forward.1} parent=1 // pred_check
      _
    $region15: #{policy_forward.1} parent=1 // pred_check_branch
      %28 = sbr.rel (0) target = $region17
    $region16: #{policy_forward.1} parent=1 // pred_region
      %s30 = ssub.s32 3072, 3072
      %31 = vsyncadd [#allocation5], %s30
      %s32 = sshll.u32 [#allocation4], 4
      %s33 = int_to_ptr.vmem [resolvable:$true] %s32
      %38 = dma.hbm_to_vmem [thread:$0]  %s3, 3072, %s33, [#allocation5], 256, 256, 16
    $region17: #{policy_forward.1} parent=1 // pred_fallthru
      _
    // Predicated region
    $region18: #{policy_forward.1} parent=1 // pred_check
      _
    $region19: #{policy_forward.1} parent=1 // pred_check_branch
      %40 = sbr.rel (0) target = $region21
    $region20: #{policy_forward.1} parent=1 // pred_region
      %41 = dma.done [#allocation3], 6144
    $region21: #{policy_forward.1} parent=1 // pred_fallthru
      _
    // Predicated region
    $region22: #{policy_forward.1} parent=1 // pred_check
      _
    $region23: #{policy_forward.1} parent=1 // pred_check_branch
      %43 = sbr.rel (0) target = $region25
    $region24: #{policy_forward.1} parent=1 // pred_region
      %44 = dma.done [#allocation5], 3072
    $region25: #{policy_forward.1} parent=1 // pred_fallthru
      _
    %v46 = vld [vmem:[#allocation2] sm:$0xff]
    %v47 = vld [vmem:[#allocation2 + $0x8] sm:$0xff]
    %v48 = vld [vmem:[#allocation2 + $0x10] sm:$0xff]
    %v49 = vld [vmem:[#allocation2 + $0x18] sm:$0xff]
    %v50 = vld [vmem:[#allocation2 + $0x20] sm:$0xff]
    %v51 = vld [vmem:[#allocation2 + $0x28] sm:$0xff]
    %v52 = vld [vmem:[#allocation2 + $0x30] sm:$0xff]
    %v53 = vld [vmem:[#allocation2 + $0x38] sm:$0xff]
    %v54 = vld [vmem:[#allocation2 + $0x40] sm:$0xff]
    %v55 = vld [vmem:[#allocation2 + $0x48] sm:$0xff]
    %v56 = vld [vmem:[#allocation2 + $0x50] sm:$0xff]
    %v57 = vld [vmem:[#allocation2 + $0x58] sm:$0xff]
    %v58 = vld [vmem:[#allocation2 + $0x60] sm:$0xff]
    %v59 = vld [vmem:[#allocation2 + $0x68] sm:$0xff]
    %v60 = vld [vmem:[#allocation2 + $0x70] sm:$0xff]
    %v61 = vld [vmem:[#allocation2 + $0x78] sm:$0xff]
    %v62 = vld [vmem:[#allocation2 + $0x80] sm:$0xf]
    %v63 = vld [vmem:[#allocation2 + $0x88] sm:$0xf]
    %v64 = vld [vmem:[#allocation2 + $0x90] sm:$0xf]
    %v65 = vld [vmem:[#allocation2 + $0x98] sm:$0xf]
    %v66 = vld [vmem:[#allocation2 + $0xa0] sm:$0xf]
    %v67 = vld [vmem:[#allocation2 + $0xa8] sm:$0xf]
    %v68 = vld [vmem:[#allocation2 + $0xb0] sm:$0xf]
    %v69 = vld [vmem:[#allocation2 + $0xb8] sm:$0xf]
    %v70 = vld [vmem:[#allocation2 + $0xc0] sm:$0xf]
    %v71 = vld [vmem:[#allocation2 + $0xc8] sm:$0xf]
    %v72 = vld [vmem:[#allocation2 + $0xd0] sm:$0xf]
    %v73 = vld [vmem:[#allocation2 + $0xd8] sm:$0xf]
    %v74 = vld [vmem:[#allocation2 + $0xe0] sm:$0xf]
    %v75 = vld [vmem:[#allocation2 + $0xe8] sm:$0xf]
    %v76 = vld [vmem:[#allocation2 + $0xf0] sm:$0xf]
    %v77 = vld [vmem:[#allocation2 + $0xf8] sm:$0xf]
    %v78 = vld [vmem:[#allocation2 + $0x100] sm:$0xf]
    %v79 = vld [vmem:[#allocation2 + $0x108] sm:$0xf]
    %v80 = vld [vmem:[#allocation2 + $0x110] sm:$0xf]
    %v81 = vld [vmem:[#allocation2 + $0x118] sm:$0xf]
    %v82 = vld [vmem:[#allocation2 + $0x120] sm:$0xf]
    %v83 = vld [vmem:[#allocation2 + $0x128] sm:$0xf]
    %v84 = vld [vmem:[#allocation2 + $0x130] sm:$0xf]
    %v85 = vld [vmem:[#allocation2 + $0x138] sm:$0xf]
    %v86 = vld [vmem:[#allocation2 + $0x140] sm:$0xf]
    %v87 = vld [vmem:[#allocation2 + $0x148] sm:$0xf]
    %v88 = vld [vmem:[#allocation2 + $0x150] sm:$0xf]
    %v89 = vld [vmem:[#allocation2 + $0x158] sm:$0xf]
    %v90 = vld [vmem:[#allocation2 + $0x160] sm:$0xf]
    %v91 = vld [vmem:[#allocation2 + $0x168] sm:$0xf]
    %v92 = vld [vmem:[#allocation2 + $0x170] sm:$0xf]
    %v93 = vld [vmem:[#allocation2 + $0x178] sm:$0xf]
    %v94 = vld [vmem:[#allocation4] sm:$0xff]
    %v95 = vld [vmem:[#allocation4 + $0x8] sm:$0xff]
    %v96 = vld [vmem:[#allocation4 + $0x10] sm:$0xff]
    %v97 = vld [vmem:[#allocation4 + $0x18] sm:$0xff]
    %v98 = vld [vmem:[#allocation4 + $0x20] sm:$0x7]
    %v99 = vld [vmem:[#allocation4 + $0x28] sm:$0x7]
    %s100 = scalar_lea.vmem [#allocation4], 48
    %v101 = vld [vmem:[%s100] ss:$8 sm:$0x3]
    %v102 = vld [vmem:[#allocation4 + $0x40] sm:$0xff]
    %v103 = vld [vmem:[#allocation4 + $0x50] sm:$0xff]
    %v104 = vld [vmem:[#allocation4 + $0x60] sm:$0x7]
    %v105 = vld [vmem:[#allocation4 + $0x70] ss:$0 sm:$0xff]
    %v106 = vld [vmem:[#allocation4 + $0x80] ss:$0 sm:$0xff]
    %v107 = vld [vmem:[#allocation4 + $0x90] ss:$0 sm:$0xff]
    %v108 = vld [vmem:[#allocation4 + $0xa0] ss:$0 sm:$0xff]
    %v109 = vld [vmem:[#allocation4 + $0xb0] ss:$0 sm:$0xff]
    %v110 = vld [vmem:[%s1] sm:$0x3]
    %v111 = vsub.f32 %v110, %v108
    %v112 = vmul.f32 %v111, %v109
    %vm113 = vcmask 154624
    %v115 = vsel %vm113, %v112, 0
    %vm117 = vcmask 1042432
    %v119 = vsel %vm117, %v98, 0
    %v122 = vsel %vm117, %v99, 0
    %124 = vmatprep.subr.mxu0 %v95
    %125 = vmatpush1.msra.mxu0 %v94
    %126 = vmatprep.subr.mxu0 %v97
    %127 = vmatpush1.msra.mxu0 %v96
    %128 = vmatprep.subr.mxu0 %v122
    %129 = vmatpush1.msra.mxu0 %v119
    %130 = vmatprep.subr.mxu0 0.0
    %131 = vmatpush1.msra.mxu0 0.0
    %132 = vmatprep.subr.mxu0 0.0
    %133 = vmatpush1.msra.mxu0 0.0
    %134 = vmatprep.subr.mxu0 0.0
    %135 = vmatpush1.msra.mxu0 0.0
    %136 = vmatprep.subr.mxu0 0.0
    %137 = vmatpush1.msra.mxu0 0.0
    %138 = vmatprep.subr.mxu0 0.0
    %139 = vmatpush1.msra.mxu0 0.0
    %140 = vmatprep.subr.mxu0 0.0
    %141 = vmatpush1.msra.mxu0 0.0
    %142 = vmatprep.subr.mxu0 0.0
    %143 = vmatpush1.msra.mxu0 0.0
    %144 = vmatprep.subr.mxu0 0.0
    %145 = vmatpush1.msra.mxu0 0.0
    %146 = vmatprep.subr.mxu0 0.0
    %147 = vmatpush1.msra.mxu0 0.0
    %148 = vmatprep.subr.mxu0 0.0
    %149 = vmatpush1.msra.mxu0 0.0
    %150 = vmatprep.subr.mxu0 0.0
    %151 = vmatpush1.msra.mxu0 0.0
    %152 = vmatprep.subr.mxu0 0.0
    %153 = vmatpush1.msra.mxu0 0.0
    %154 = vmatprep.subr.mxu0 0.0
    %155 = vmatpush1.msra.mxu0 0.0
    %156 = vmatprep.subr.mxu0 0.0
    %157 = vmatpush1.msra.mxu0 0.0
    %158 = vmatprep.subr.mxu0 0.0
    %159 = vmatpush1.msra.mxu0 0.0
    %160 = vmatprep.subr.mxu0 0.0
    %161 = vmatpush1.msra.mxu0 0.0
    %162 = vmatprep.subr.mxu0 0.0
    %163 = vmatpush1.msra.mxu0 0.0
    %164 = vmatprep.subr.mxu0 0.0
    %165 = vmatpush1.msra.mxu0 0.0
    %166 = vmatprep.subr.mxu0 0.0
    %167 = vmatpush1.msra.mxu0 0.0
    %168 = vmatprep.subr.mxu0 0.0
    %169 = vmatpush1.msra.mxu0 0.0
    %170 = vmatprep.subr.mxu0 0.0
    %171 = vmatpush1.msra.mxu0 0.0
    %172 = vmatprep.subr.mxu0 0.0
    %173 = vmatpush1.msra.mxu0 0.0
    %174 = vmatprep.subr.mxu0 0.0
    %175 = vmatpush1.msra.mxu0 0.0
    %176 = vmatprep.subr.mxu0 0.0
    %177 = vmatpush1.msra.mxu0 0.0
    %178 = vmatprep.subr.mxu0 0.0
    %179 = vmatpush1.msra.mxu0 0.0
    %180 = vmatprep.subr.mxu0 0.0
    %181 = vmatpush1.msra.mxu0 0.0
    %182 = vmatprep.subr.mxu0 0.0
    %183 = vmatpush1.msra.mxu0 0.0
    %184 = vmatprep.subr.mxu0 0.0
    %185 = vmatpush1.msra.mxu0 0.0
    %186 = vmatprep.subr.mxu0 0.0
    %187 = vmatpush1.msra.mxu0 0.0
    %188 = vmatprep.mubr.f32.mxu0 0.0
    %189 = vmatmul.mubr.f32.gmra.mrb[0].mxu0 %v115
    %v190 = vpop.f32.mrb[0].mxu0
    %v191 = vadd.f32 0.0, %v190
    %v192 = vpop.f32.mrb[0].mxu0
    %v193 = vadd.f32 0.0, %v192
    %194 = vdwg.mxu0
    %v196 = vsel %vm117, %v104, 0
    %198 = vmatprep.subr.mxu0 0.0
    %199 = vmatpush1.msra.mxu0 %v102
    %200 = vmatprep.subr.mxu0 0.0
    %201 = vmatpush1.msra.mxu0 %v103
    %202 = vmatprep.subr.mxu0 0.0
    %203 = vmatpush1.msra.mxu0 %v196
    %204 = vmatprep.subr.mxu0 0.0
    %205 = vmatpush1.msra.mxu0 0.0
    %206 = vmatprep.subr.mxu0 0.0
    %207 = vmatpush1.msra.mxu0 0.0
    %208 = vmatprep.subr.mxu0 0.0
    %209 = vmatpush1.msra.mxu0 0.0
    %210 = vmatprep.subr.mxu0 0.0
    %211 = vmatpush1.msra.mxu0 0.0
    %212 = vmatprep.subr.mxu0 0.0
    %213 = vmatpush1.msra.mxu0 0.0
    %214 = vmatprep.subr.mxu0 0.0
    %215 = vmatpush1.msra.mxu0 0.0
    %216 = vmatprep.subr.mxu0 0.0
    %217 = vmatpush1.msra.mxu0 0.0
    %218 = vmatprep.subr.mxu0 0.0
    %219 = vmatpush1.msra.mxu0 0.0
    %220 = vmatprep.subr.mxu0 0.0
    %221 = vmatpush1.msra.mxu0 0.0
    %222 = vmatprep.subr.mxu0 0.0
    %223 = vmatpush1.msra.mxu0 0.0
    %224 = vmatprep.subr.mxu0 0.0
    %225 = vmatpush1.msra.mxu0 0.0
    %226 = vmatprep.subr.mxu0 0.0
    %227 = vmatpush1.msra.mxu0 0.0
    %228 = vmatprep.subr.mxu0 0.0
    %229 = vmatpush1.msra.mxu0 0.0
    %230 = vmatprep.subr.mxu0 0.0
    %231 = vmatpush1.msra.mxu0 0.0
    %232 = vmatprep.subr.mxu0 0.0
    %233 = vmatpush1.msra.mxu0 0.0
    %234 = vmatprep.subr.mxu0 0.0
    %235 = vmatpush1.msra.mxu0 0.0
    %236 = vmatprep.subr.mxu0 0.0
    %237 = vmatpush1.msra.mxu0 0.0
    %238 = vmatprep.subr.mxu0 0.0
    %239 = vmatpush1.msra.mxu0 0.0
    %240 = vmatprep.subr.mxu0 0.0
    %241 = vmatpush1.msra.mxu0 0.0
    %242 = vmatprep.subr.mxu0 0.0
    %243 = vmatpush1.msra.mxu0 0.0
    %244 = vmatprep.subr.mxu0 0.0
    %245 = vmatpush1.msra.mxu0 0.0
    %246 = vmatprep.subr.mxu0 0.0
    %247 = vmatpush1.msra.mxu0 0.0
    %248 = vmatprep.subr.mxu0 0.0
    %249 = vmatpush1.msra.mxu0 0.0
    %250 = vmatprep.subr.mxu0 0.0
    %251 = vmatpush1.msra.mxu0 0.0
    %252 = vmatprep.subr.mxu0 0.0
    %253 = vmatpush1.msra.mxu0 0.0
    %254 = vmatprep.subr.mxu0 0.0
    %255 = vmatpush1.msra.mxu0 0.0
    %256 = vmatprep.subr.mxu0 0.0
    %257 = vmatpush1.msra.mxu0 0.0
    %258 = vmatprep.subr.mxu0 0.0
    %259 = vmatpush1.msra.mxu0 0.0
    %260 = vmatprep.subr.mxu0 0.0
    %261 = vmatpush1.msra.mxu0 0.0
    %262 = vmatprep.mubr.f32.mxu0 0.0
    %263 = vmatmul.mubr.f32.gmra.mrb[0].mxu0 %v115
    %v264 = vpop.f32.mrb[0].mxu0
    %v265 = vadd.f32 0.0, %v264
    %v266 = vpop.f32.mrb[0].mxu0
    %267 = vdwg.mxu0
    %v269 = vlaneseq
    %v270 = vshrl.u32 %v269, 7
    %v271 = vsub.s32 0, %v270
    %v272 = vrot.slane %v101, %v271
    %v273 = vlaneseq
    %v274 = vshrl.u32 %v273, 7
    %v275 = vsub.s32 1, %v274
    %v276 = vrot.slane %v101, %v275
    %v279 = vlaneseq
    %v280 = vand.u32 %v279, 127
    %v281 = vand.u32 %v280, 15
    %v282 = vshra.s32 %v280, 4
    %vm283 = vcmp.ge.s32.totalorder %v281, 7
    %vm284 = vcmp.eq.s32.totalorder %v282, 0
    %vm285 = vcmp.eq.s32.totalorder %v282, 7
    %vm286 = vmor %vm284, %vm285
    %vm287 = vmand %vm283, %vm286
    %v288 = vld [vmem:[%s0] sm:$0x3]
    %v289 = vsel %vm287, %v265, %v288
    %v290 = vpack.c.bf16 %v289, %v289
    %v307 = vunpack.c.l.b16 %v46
    %v308 = vunpack.c.h.b16 %v46
    %v309 = vunpack.c.l.b16 %v47
    %v310 = vunpack.c.h.b16 %v47
    %v311 = vunpack.c.l.b16 %v48
    %v312 = vunpack.c.h.b16 %v48
    %v313 = vunpack.c.l.b16 %v49
    %v314 = vunpack.c.h.b16 %v49
    %v315 = vunpack.c.l.b16 %v50
    %v316 = vunpack.c.h.b16 %v50
    %v317 = vunpack.c.l.b16 %v51
    %v318 = vunpack.c.h.b16 %v51
    %v319 = vunpack.c.l.b16 %v52
    %v320 = vunpack.c.h.b16 %v52
    %v321 = vunpack.c.l.b16 %v53
    %v322 = vunpack.c.h.b16 %v53
    %v323 = vunpack.c.l.b16 %v54
    %v324 = vunpack.c.h.b16 %v54
    %v325 = vunpack.c.l.b16 %v55
    %v326 = vunpack.c.h.b16 %v55
    %v327 = vunpack.c.l.b16 %v56
    %v328 = vunpack.c.h.b16 %v56
    %v329 = vunpack.c.l.b16 %v57
    %v330 = vunpack.c.h.b16 %v57
    %v331 = vunpack.c.l.b16 %v58
    %v332 = vunpack.c.h.b16 %v58
    %v333 = vunpack.c.l.b16 %v59
    %v334 = vunpack.c.h.b16 %v59
    %v335 = vunpack.c.l.b16 %v60
    %v336 = vunpack.c.h.b16 %v60
    %v337 = vunpack.c.l.b16 %v61
    %v338 = vunpack.c.h.b16 %v61
    %v339 = vpack.c.b16 %v309, %v307
    %v340 = vpack.c.b16 %v310, %v308
    %v341 = vpack.c.b16 %v313, %v311
    %v342 = vpack.c.b16 %v314, %v312
    %v343 = vpack.c.b16 %v317, %v315
    %v344 = vpack.c.b16 %v318, %v316
    %v345 = vpack.c.b16 %v321, %v319
    %v346 = vpack.c.b16 %v322, %v320
    %v347 = vpack.c.b16 %v325, %v323
    %v348 = vpack.c.b16 %v326, %v324
    %v349 = vpack.c.b16 %v329, %v327
    %v350 = vpack.c.b16 %v330, %v328
    %v351 = vpack.c.b16 %v333, %v331
    %v352 = vpack.c.b16 %v334, %v332
    %v353 = vpack.c.b16 %v337, %v335
    %v354 = vpack.c.b16 %v338, %v336
    %371 = vmatprep.subr.bf16.mxu0 %v340
    %372 = vmatpush1.bf16.msra.mxu0 %v339
    %373 = vmatprep.subr.bf16.mxu0 %v342
    %374 = vmatpush1.bf16.msra.mxu0 %v341
    %375 = vmatprep.subr.bf16.mxu0 %v344
    %376 = vmatpush1.bf16.msra.mxu0 %v343
    %377 = vmatprep.subr.bf16.mxu0 %v346
    %378 = vmatpush1.bf16.msra.mxu0 %v345
    %379 = vmatprep.subr.bf16.mxu0 %v348
    %380 = vmatpush1.bf16.msra.mxu0 %v347
    %381 = vmatprep.subr.bf16.mxu0 %v350
    %382 = vmatpush1.bf16.msra.mxu0 %v349
    %383 = vmatprep.subr.bf16.mxu0 %v352
    %384 = vmatpush1.bf16.msra.mxu0 %v351
    %385 = vmatprep.subr.bf16.mxu0 %v354
    %386 = vmatpush1.bf16.msra.mxu0 %v353
    %387 = vmatprep.subr.bf16.mxu0 0
    %388 = vmatpush1.bf16.msra.mxu0 0
    %389 = vmatprep.subr.bf16.mxu0 0
    %390 = vmatpush1.bf16.msra.mxu0 0
    %391 = vmatprep.subr.bf16.mxu0 0
    %392 = vmatpush1.bf16.msra.mxu0 0
    %393 = vmatprep.subr.bf16.mxu0 0
    %394 = vmatpush1.bf16.msra.mxu0 0
    %395 = vmatprep.subr.bf16.mxu0 0
    %396 = vmatpush1.bf16.msra.mxu0 0
    %397 = vmatprep.subr.bf16.mxu0 0
    %398 = vmatpush1.bf16.msra.mxu0 0
    %399 = vmatprep.subr.bf16.mxu0 0
    %400 = vmatpush1.bf16.msra.mxu0 0
    %401 = vmatprep.subr.bf16.mxu0 0
    %402 = vmatpush1.bf16.msra.mxu0 0
    %403 = vmatprep.mubr.bf16.mxu0 0
    %404 = vmatmul.mubr.bf16.gmra.mrb[0].mxu0 %v290
    %v405 = vpop.f32.mrb[0].mxu0
    %v406 = vadd.f32 %v191, %v405
    %v407 = vpop.f32.mrb[0].mxu0
    %v408 = vadd.f32 %v193, %v407
    %v409 = vpop.f32.mrb[0].mxu0
    %v410 = vpop.f32.mrb[0].mxu0
    %411 = vdwg.mxu0
    %v412 = vtanh.pop %v406
    %v413 = vtanh.pop %v408
    %v414 = vpack.c.bf16 %v412, %v412
    %v415 = vpack.c.bf16 %v413, %v413
    %v448 = vunpack.c.l.b16 %v62
    %v449 = vunpack.c.l.b16 %v63
    %v450 = vunpack.c.l.b16 %v64
    %v451 = vunpack.c.l.b16 %v65
    %v452 = vunpack.c.l.b16 %v66
    %v453 = vunpack.c.l.b16 %v67
    %v454 = vunpack.c.l.b16 %v68
    %v455 = vunpack.c.l.b16 %v69
    %v456 = vunpack.c.l.b16 %v70
    %v457 = vunpack.c.l.b16 %v71
    %v458 = vunpack.c.l.b16 %v72
    %v459 = vunpack.c.l.b16 %v73
    %v460 = vunpack.c.l.b16 %v74
    %v461 = vunpack.c.l.b16 %v75
    %v462 = vunpack.c.l.b16 %v76
    %v463 = vunpack.c.l.b16 %v77
    %v464 = vunpack.c.l.b16 %v78
    %v465 = vunpack.c.l.b16 %v79
    %v466 = vunpack.c.l.b16 %v80
    %v467 = vunpack.c.l.b16 %v81
    %v468 = vunpack.c.l.b16 %v82
    %v469 = vunpack.c.l.b16 %v83
    %v470 = vunpack.c.l.b16 %v84
    %v471 = vunpack.c.l.b16 %v85
    %v472 = vunpack.c.l.b16 %v86
    %v473 = vunpack.c.l.b16 %v87
    %v474 = vunpack.c.l.b16 %v88
    %v475 = vunpack.c.l.b16 %v89
    %v476 = vunpack.c.l.b16 %v90
    %v477 = vunpack.c.l.b16 %v91
    %v478 = vunpack.c.l.b16 %v92
    %v479 = vunpack.c.l.b16 %v93
    %v480 = vpack.c.b16 %v449, %v448
    %v481 = vpack.c.b16 %v451, %v450
    %v482 = vpack.c.b16 %v453, %v452
    %v483 = vpack.c.b16 %v455, %v454
    %v484 = vpack.c.b16 %v457, %v456
    %v485 = vpack.c.b16 %v459, %v458
    %v486 = vpack.c.b16 %v461, %v460
    %v487 = vpack.c.b16 %v463, %v462
    %v488 = vpack.c.b16 %v465, %v464
    %v489 = vpack.c.b16 %v467, %v466
    %v490 = vpack.c.b16 %v469, %v468
    %v491 = vpack.c.b16 %v471, %v470
    %v492 = vpack.c.b16 %v473, %v472
    %v493 = vpack.c.b16 %v475, %v474
    %v494 = vpack.c.b16 %v477, %v476
    %v495 = vpack.c.b16 %v479, %v478
    %512 = vmatprep.subr.bf16.mxu0 0
    %513 = vmatpush1.bf16.msra.mxu0 %v480
    %514 = vmatprep.subr.bf16.mxu0 0
    %515 = vmatpush1.bf16.msra.mxu0 %v481
    %516 = vmatprep.subr.bf16.mxu0 0
    %517 = vmatpush1.bf16.msra.mxu0 %v482
    %518 = vmatprep.subr.bf16.mxu0 0
    %519 = vmatpush1.bf16.msra.mxu0 %v483
    %520 = vmatprep.subr.bf16.mxu0 0
    %521 = vmatpush1.bf16.msra.mxu0 %v484
    %522 = vmatprep.subr.bf16.mxu0 0
    %523 = vmatpush1.bf16.msra.mxu0 %v485
    %524 = vmatprep.subr.bf16.mxu0 0
    %525 = vmatpush1.bf16.msra.mxu0 %v486
    %526 = vmatprep.subr.bf16.mxu0 0
    %527 = vmatpush1.bf16.msra.mxu0 %v487
    %528 = vmatprep.subr.bf16.mxu0 0
    %529 = vmatpush1.bf16.msra.mxu0 %v488
    %530 = vmatprep.subr.bf16.mxu0 0
    %531 = vmatpush1.bf16.msra.mxu0 %v489
    %532 = vmatprep.subr.bf16.mxu0 0
    %533 = vmatpush1.bf16.msra.mxu0 %v490
    %534 = vmatprep.subr.bf16.mxu0 0
    %535 = vmatpush1.bf16.msra.mxu0 %v491
    %536 = vmatprep.subr.bf16.mxu0 0
    %537 = vmatpush1.bf16.msra.mxu0 %v492
    %538 = vmatprep.subr.bf16.mxu0 0
    %539 = vmatpush1.bf16.msra.mxu0 %v493
    %540 = vmatprep.subr.bf16.mxu0 0
    %541 = vmatpush1.bf16.msra.mxu0 %v494
    %542 = vmatprep.subr.bf16.mxu0 0
    %543 = vmatpush1.bf16.msra.mxu0 %v495
    %544 = vmatprep.mubr.bf16.mxu0 %v415
    %545 = vmatmul.mubr.bf16.gmra.mrb[0].mxu0 %v414
    %v546 = vpop.f32.mrb[0].mxu0
    %v547 = vadd.f32 0.0, %v546
    %v548 = vpop.f32.mrb[0].mxu0
    %v549 = vpop.f32.mrb[0].mxu0
    %v550 = vpop.f32.mrb[0].mxu0
    %551 = vdwg.mxu0
    %v552 = vadd.f32 %v289, %v547
    %v553 = vadd.f32 %v552, %v105
    %v554 = vadd.f32 %v191, %v272
    %v555 = vadd.f32 %v193, %v276
    %v556 = vsel %vm287, %v265, %v553
    %v557 = vpack.c.bf16 %v556, %v556
    %558 = vmatprep.subr.bf16.mxu0 %v340
    %559 = vmatpush1.bf16.msra.mxu0 %v339
    %560 = vmatprep.subr.bf16.mxu0 %v342
    %561 = vmatpush1.bf16.msra.mxu0 %v341
    %562 = vmatprep.subr.bf16.mxu0 %v344
    %563 = vmatpush1.bf16.msra.mxu0 %v343
    %564 = vmatprep.subr.bf16.mxu0 %v346
    %565 = vmatpush1.bf16.msra.mxu0 %v345
    %566 = vmatprep.subr.bf16.mxu0 %v348
    %567 = vmatpush1.bf16.msra.mxu0 %v347
    %568 = vmatprep.subr.bf16.mxu0 %v350
    %569 = vmatpush1.bf16.msra.mxu0 %v349
    %570 = vmatprep.subr.bf16.mxu0 %v352
    %571 = vmatpush1.bf16.msra.mxu0 %v351
    %572 = vmatprep.subr.bf16.mxu0 %v354
    %573 = vmatpush1.bf16.msra.mxu0 %v353
    %574 = vmatprep.subr.bf16.mxu0 0
    %575 = vmatpush1.bf16.msra.mxu0 0
    %576 = vmatprep.subr.bf16.mxu0 0
    %577 = vmatpush1.bf16.msra.mxu0 0
    %578 = vmatprep.subr.bf16.mxu0 0
    %579 = vmatpush1.bf16.msra.mxu0 0
    %580 = vmatprep.subr.bf16.mxu0 0
    %581 = vmatpush1.bf16.msra.mxu0 0
    %582 = vmatprep.subr.bf16.mxu0 0
    %583 = vmatpush1.bf16.msra.mxu0 0
    %584 = vmatprep.subr.bf16.mxu0 0
    %585 = vmatpush1.bf16.msra.mxu0 0
    %586 = vmatprep.subr.bf16.mxu0 0
    %587 = vmatpush1.bf16.msra.mxu0 0
    %588 = vmatprep.subr.bf16.mxu0 0
    %589 = vmatpush1.bf16.msra.mxu0 0
    %590 = vmatprep.mubr.bf16.mxu0 0
    %591 = vmatmul.mubr.bf16.gmra.mrb[0].mxu0 %v557
    %v592 = vpop.f32.mrb[0].mxu0
    %v593 = vadd.f32 %v554, %v592
    %v594 = vpop.f32.mrb[0].mxu0
    %v595 = vadd.f32 %v555, %v594
    %v596 = vpop.f32.mrb[0].mxu0
    %v597 = vpop.f32.mrb[0].mxu0
    %598 = vdwg.mxu0
    %v599 = vtanh.pop %v593
    %v600 = vtanh.pop %v595
    %v601 = vpack.c.bf16 %v599, %v599
    %v602 = vpack.c.bf16 %v600, %v600
    %603 = vmatprep.subr.bf16.mxu0 0
    %604 = vmatpush1.bf16.msra.mxu0 %v480
    %605 = vmatprep.subr.bf16.mxu0 0
    %606 = vmatpush1.bf16.msra.mxu0 %v481
    %607 = vmatprep.subr.bf16.mxu0 0
    %608 = vmatpush1.bf16.msra.mxu0 %v482
    %609 = vmatprep.subr.bf16.mxu0 0
    %610 = vmatpush1.bf16.msra.mxu0 %v483
    %611 = vmatprep.subr.bf16.mxu0 0
    %612 = vmatpush1.bf16.msra.mxu0 %v484
    %613 = vmatprep.subr.bf16.mxu0 0
    %614 = vmatpush1.bf16.msra.mxu0 %v485
    %615 = vmatprep.subr.bf16.mxu0 0
    %616 = vmatpush1.bf16.msra.mxu0 %v486
    %617 = vmatprep.subr.bf16.mxu0 0
    %618 = vmatpush1.bf16.msra.mxu0 %v487
    %619 = vmatprep.subr.bf16.mxu0 0
    %620 = vmatpush1.bf16.msra.mxu0 %v488
    %621 = vmatprep.subr.bf16.mxu0 0
    %622 = vmatpush1.bf16.msra.mxu0 %v489
    %623 = vmatprep.subr.bf16.mxu0 0
    %624 = vmatpush1.bf16.msra.mxu0 %v490
    %625 = vmatprep.subr.bf16.mxu0 0
    %626 = vmatpush1.bf16.msra.mxu0 %v491
    %627 = vmatprep.subr.bf16.mxu0 0
    %628 = vmatpush1.bf16.msra.mxu0 %v492
    %629 = vmatprep.subr.bf16.mxu0 0
    %630 = vmatpush1.bf16.msra.mxu0 %v493
    %631 = vmatprep.subr.bf16.mxu0 0
    %632 = vmatpush1.bf16.msra.mxu0 %v494
    %633 = vmatprep.subr.bf16.mxu0 0
    %634 = vmatpush1.bf16.msra.mxu0 %v495
    %635 = vmatprep.mubr.bf16.mxu0 %v602
    %636 = vmatmul.mubr.bf16.gmra.mrb[0].mxu0 %v601
    %v637 = vpop.f32.mrb[0].mxu0
    %v638 = vadd.f32 0.0, %v637
    %v639 = vpop.f32.mrb[0].mxu0
    %v640 = vpop.f32.mrb[0].mxu0
    %v641 = vpop.f32.mrb[0].mxu0
    %642 = vdwg.mxu0
    %v643 = vadd.f32 %v556, %v638
    %v644 = vadd.f32 %v643, %v105
    %v645 = vadd.f32 %v554, %v272
    %v646 = vadd.f32 %v555, %v276
    %v647 = vsel %vm287, %v265, %v644
    %v648 = vpack.c.bf16 %v647, %v647
    %649 = vmatprep.subr.bf16.mxu0 %v340
    %650 = vmatpush1.bf16.msra.mxu0 %v339
    %651 = vmatprep.subr.bf16.mxu0 %v342
    %652 = vmatpush1.bf16.msra.mxu0 %v341
    %653 = vmatprep.subr.bf16.mxu0 %v344
    %654 = vmatpush1.bf16.msra.mxu0 %v343
    %655 = vmatprep.subr.bf16.mxu0 %v346
    %656 = vmatpush1.bf16.msra.mxu0 %v345
    %657 = vmatprep.subr.bf16.mxu0 %v348
    %658 = vmatpush1.bf16.msra.mxu0 %v347
    %659 = vmatprep.subr.bf16.mxu0 %v350
    %660 = vmatpush1.bf16.msra.mxu0 %v349
    %661 = vmatprep.subr.bf16.mxu0 %v352
    %662 = vmatpush1.bf16.msra.mxu0 %v351
    %663 = vmatprep.subr.bf16.mxu0 %v354
    %664 = vmatpush1.bf16.msra.mxu0 %v353
    %665 = vmatprep.subr.bf16.mxu0 0
    %666 = vmatpush1.bf16.msra.mxu0 0
    %667 = vmatprep.subr.bf16.mxu0 0
    %668 = vmatpush1.bf16.msra.mxu0 0
    %669 = vmatprep.subr.bf16.mxu0 0
    %670 = vmatpush1.bf16.msra.mxu0 0
    %671 = vmatprep.subr.bf16.mxu0 0
    %672 = vmatpush1.bf16.msra.mxu0 0
    %673 = vmatprep.subr.bf16.mxu0 0
    %674 = vmatpush1.bf16.msra.mxu0 0
    %675 = vmatprep.subr.bf16.mxu0 0
    %676 = vmatpush1.bf16.msra.mxu0 0
    %677 = vmatprep.subr.bf16.mxu0 0
    %678 = vmatpush1.bf16.msra.mxu0 0
    %679 = vmatprep.subr.bf16.mxu0 0
    %680 = vmatpush1.bf16.msra.mxu0 0
    %681 = vmatprep.mubr.bf16.mxu0 0
    %682 = vmatmul.mubr.bf16.gmra.mrb[0].mxu0 %v648
    %v683 = vpop.f32.mrb[0].mxu0
    %v684 = vadd.f32 %v645, %v683
    %v685 = vpop.f32.mrb[0].mxu0
    %v686 = vadd.f32 %v646, %v685
    %v687 = vpop.f32.mrb[0].mxu0
    %v688 = vpop.f32.mrb[0].mxu0
    %689 = vdwg.mxu0
    %v690 = vtanh.pop %v684
    %v691 = vtanh.pop %v686
    %v692 = vpack.c.bf16 %v690, %v690
    %v693 = vpack.c.bf16 %v691, %v691
    %694 = vmatprep.subr.bf16.mxu0 0
    %695 = vmatpush1.bf16.msra.mxu0 %v480
    %696 = vmatprep.subr.bf16.mxu0 0
    %697 = vmatpush1.bf16.msra.mxu0 %v481
    %698 = vmatprep.subr.bf16.mxu0 0
    %699 = vmatpush1.bf16.msra.mxu0 %v482
    %700 = vmatprep.subr.bf16.mxu0 0
    %701 = vmatpush1.bf16.msra.mxu0 %v483
    %702 = vmatprep.subr.bf16.mxu0 0
    %703 = vmatpush1.bf16.msra.mxu0 %v484
    %704 = vmatprep.subr.bf16.mxu0 0
    %705 = vmatpush1.bf16.msra.mxu0 %v485
    %706 = vmatprep.subr.bf16.mxu0 0
    %707 = vmatpush1.bf16.msra.mxu0 %v486
    %708 = vmatprep.subr.bf16.mxu0 0
    %709 = vmatpush1.bf16.msra.mxu0 %v487
    %710 = vmatprep.subr.bf16.mxu0 0
    %711 = vmatpush1.bf16.msra.mxu0 %v488
    %712 = vmatprep.subr.bf16.mxu0 0
    %713 = vmatpush1.bf16.msra.mxu0 %v489
    %714 = vmatprep.subr.bf16.mxu0 0
    %715 = vmatpush1.bf16.msra.mxu0 %v490
    %716 = vmatprep.subr.bf16.mxu0 0
    %717 = vmatpush1.bf16.msra.mxu0 %v491
    %718 = vmatprep.subr.bf16.mxu0 0
    %719 = vmatpush1.bf16.msra.mxu0 %v492
    %720 = vmatprep.subr.bf16.mxu0 0
    %721 = vmatpush1.bf16.msra.mxu0 %v493
    %722 = vmatprep.subr.bf16.mxu0 0
    %723 = vmatpush1.bf16.msra.mxu0 %v494
    %724 = vmatprep.subr.bf16.mxu0 0
    %725 = vmatpush1.bf16.msra.mxu0 %v495
    %726 = vmatprep.mubr.bf16.mxu0 %v693
    %727 = vmatmul.mubr.bf16.gmra.mrb[0].mxu0 %v692
    %v728 = vpop.f32.mrb[0].mxu0
    %v729 = vadd.f32 0.0, %v728
    %v730 = vpop.f32.mrb[0].mxu0
    %v731 = vpop.f32.mrb[0].mxu0
    %v732 = vpop.f32.mrb[0].mxu0
    %733 = vdwg.mxu0
    %v734 = vadd.f32 %v647, %v729
    %v735 = vadd.f32 %v734, %v105
    %v736 = vadd.f32 %v645, %v272
    %v737 = vadd.f32 %v646, %v276
    %v738 = vsel %vm287, %v265, %v735
    %v739 = vpack.c.bf16 %v738, %v738
    %740 = vmatprep.subr.bf16.mxu0 %v340
    %741 = vmatpush1.bf16.msra.mxu0 %v339
    %742 = vmatprep.subr.bf16.mxu0 %v342
    %743 = vmatpush1.bf16.msra.mxu0 %v341
    %744 = vmatprep.subr.bf16.mxu0 %v344
    %745 = vmatpush1.bf16.msra.mxu0 %v343
    %746 = vmatprep.subr.bf16.mxu0 %v346
    %747 = vmatpush1.bf16.msra.mxu0 %v345
    %748 = vmatprep.subr.bf16.mxu0 %v348
    %749 = vmatpush1.bf16.msra.mxu0 %v347
    %750 = vmatprep.subr.bf16.mxu0 %v350
    %751 = vmatpush1.bf16.msra.mxu0 %v349
    %752 = vmatprep.subr.bf16.mxu0 %v352
    %753 = vmatpush1.bf16.msra.mxu0 %v351
    %754 = vmatprep.subr.bf16.mxu0 %v354
    %755 = vmatpush1.bf16.msra.mxu0 %v353
    %756 = vmatprep.subr.bf16.mxu0 0
    %757 = vmatpush1.bf16.msra.mxu0 0
    %758 = vmatprep.subr.bf16.mxu0 0
    %759 = vmatpush1.bf16.msra.mxu0 0
    %760 = vmatprep.subr.bf16.mxu0 0
    %761 = vmatpush1.bf16.msra.mxu0 0
    %762 = vmatprep.subr.bf16.mxu0 0
    %763 = vmatpush1.bf16.msra.mxu0 0
    %764 = vmatprep.subr.bf16.mxu0 0
    %765 = vmatpush1.bf16.msra.mxu0 0
    %766 = vmatprep.subr.bf16.mxu0 0
    %767 = vmatpush1.bf16.msra.mxu0 0
    %768 = vmatprep.subr.bf16.mxu0 0
    %769 = vmatpush1.bf16.msra.mxu0 0
    %770 = vmatprep.subr.bf16.mxu0 0
    %771 = vmatpush1.bf16.msra.mxu0 0
    %772 = vmatprep.mubr.bf16.mxu0 0
    %773 = vmatmul.mubr.bf16.gmra.mrb[0].mxu0 %v739
    %v774 = vpop.f32.mrb[0].mxu0
    %v775 = vadd.f32 %v736, %v774
    %v776 = vpop.f32.mrb[0].mxu0
    %v777 = vadd.f32 %v737, %v776
    %v778 = vpop.f32.mrb[0].mxu0
    %v779 = vpop.f32.mrb[0].mxu0
    %780 = vdwg.mxu0
    %v781 = vtanh.pop %v775
    %v782 = vtanh.pop %v777
    %v783 = vpack.c.bf16 %v781, %v781
    %v784 = vpack.c.bf16 %v782, %v782
    %785 = vmatprep.subr.bf16.mxu0 0
    %786 = vmatpush1.bf16.msra.mxu0 %v480
    %787 = vmatprep.subr.bf16.mxu0 0
    %788 = vmatpush1.bf16.msra.mxu0 %v481
    %789 = vmatprep.subr.bf16.mxu0 0
    %790 = vmatpush1.bf16.msra.mxu0 %v482
    %791 = vmatprep.subr.bf16.mxu0 0
    %792 = vmatpush1.bf16.msra.mxu0 %v483
    %793 = vmatprep.subr.bf16.mxu0 0
    %794 = vmatpush1.bf16.msra.mxu0 %v484
    %795 = vmatprep.subr.bf16.mxu0 0
    %796 = vmatpush1.bf16.msra.mxu0 %v485
    %797 = vmatprep.subr.bf16.mxu0 0
    %798 = vmatpush1.bf16.msra.mxu0 %v486
    %799 = vmatprep.subr.bf16.mxu0 0
    %800 = vmatpush1.bf16.msra.mxu0 %v487
    %801 = vmatprep.subr.bf16.mxu0 0
    %802 = vmatpush1.bf16.msra.mxu0 %v488
    %803 = vmatprep.subr.bf16.mxu0 0
    %804 = vmatpush1.bf16.msra.mxu0 %v489
    %805 = vmatprep.subr.bf16.mxu0 0
    %806 = vmatpush1.bf16.msra.mxu0 %v490
    %807 = vmatprep.subr.bf16.mxu0 0
    %808 = vmatpush1.bf16.msra.mxu0 %v491
    %809 = vmatprep.subr.bf16.mxu0 0
    %810 = vmatpush1.bf16.msra.mxu0 %v492
    %811 = vmatprep.subr.bf16.mxu0 0
    %812 = vmatpush1.bf16.msra.mxu0 %v493
    %813 = vmatprep.subr.bf16.mxu0 0
    %814 = vmatpush1.bf16.msra.mxu0 %v494
    %815 = vmatprep.subr.bf16.mxu0 0
    %816 = vmatpush1.bf16.msra.mxu0 %v495
    %817 = vmatprep.mubr.bf16.mxu0 %v784
    %818 = vmatmul.mubr.bf16.gmra.mrb[0].mxu0 %v783
    %v819 = vpop.f32.mrb[0].mxu0
    %v820 = vadd.f32 0.0, %v819
    %v821 = vpop.f32.mrb[0].mxu0
    %v822 = vpop.f32.mrb[0].mxu0
    %v823 = vpop.f32.mrb[0].mxu0
    %824 = vdwg.mxu0
    %v825 = vadd.f32 %v738, %v820
    %v826 = vadd.f32 %v825, %v105
    %v827 = vadd.f32 %v736, %v272
    %v828 = vadd.f32 %v737, %v276
    %v829 = vsel %vm287, %v265, %v826
    %v830 = vpack.c.bf16 %v829, %v829
    %831 = vmatprep.subr.bf16.mxu0 %v340
    %832 = vmatpush1.bf16.msra.mxu0 %v339
    %833 = vmatprep.subr.bf16.mxu0 %v342
    %834 = vmatpush1.bf16.msra.mxu0 %v341
    %835 = vmatprep.subr.bf16.mxu0 %v344
    %836 = vmatpush1.bf16.msra.mxu0 %v343
    %837 = vmatprep.subr.bf16.mxu0 %v346
    %838 = vmatpush1.bf16.msra.mxu0 %v345
    %839 = vmatprep.subr.bf16.mxu0 %v348
    %840 = vmatpush1.bf16.msra.mxu0 %v347
    %841 = vmatprep.subr.bf16.mxu0 %v350
    %842 = vmatpush1.bf16.msra.mxu0 %v349
    %843 = vmatprep.subr.bf16.mxu0 %v352
    %844 = vmatpush1.bf16.msra.mxu0 %v351
    %845 = vmatprep.subr.bf16.mxu0 %v354
    %846 = vmatpush1.bf16.msra.mxu0 %v353
    %847 = vmatprep.subr.bf16.mxu0 0
    %848 = vmatpush1.bf16.msra.mxu0 0
    %849 = vmatprep.subr.bf16.mxu0 0
    %850 = vmatpush1.bf16.msra.mxu0 0
    %851 = vmatprep.subr.bf16.mxu0 0
    %852 = vmatpush1.bf16.msra.mxu0 0
    %853 = vmatprep.subr.bf16.mxu0 0
    %854 = vmatpush1.bf16.msra.mxu0 0
    %855 = vmatprep.subr.bf16.mxu0 0
    %856 = vmatpush1.bf16.msra.mxu0 0
    %857 = vmatprep.subr.bf16.mxu0 0
    %858 = vmatpush1.bf16.msra.mxu0 0
    %859 = vmatprep.subr.bf16.mxu0 0
    %860 = vmatpush1.bf16.msra.mxu0 0
    %861 = vmatprep.subr.bf16.mxu0 0
    %862 = vmatpush1.bf16.msra.mxu0 0
    %863 = vmatprep.mubr.bf16.mxu0 0
    %864 = vmatmul.mubr.bf16.gmra.mrb[0].mxu0 %v830
    %v865 = vpop.f32.mrb[0].mxu0
    %v866 = vadd.f32 %v827, %v865
    %v867 = vpop.f32.mrb[0].mxu0
    %v868 = vadd.f32 %v828, %v867
    %v869 = vpop.f32.mrb[0].mxu0
    %v870 = vpop.f32.mrb[0].mxu0
    %871 = vdwg.mxu0
    %v872 = vtanh.pop %v866
    %v873 = vtanh.pop %v868
    %v874 = vpack.c.bf16 %v872, %v872
    %v875 = vpack.c.bf16 %v873, %v873
    %876 = vmatprep.subr.bf16.mxu0 0
    %877 = vmatpush1.bf16.msra.mxu0 %v480
    %878 = vmatprep.subr.bf16.mxu0 0
    %879 = vmatpush1.bf16.msra.mxu0 %v481
    %880 = vmatprep.subr.bf16.mxu0 0
    %881 = vmatpush1.bf16.msra.mxu0 %v482
    %882 = vmatprep.subr.bf16.mxu0 0
    %883 = vmatpush1.bf16.msra.mxu0 %v483
    %884 = vmatprep.subr.bf16.mxu0 0
    %885 = vmatpush1.bf16.msra.mxu0 %v484
    %886 = vmatprep.subr.bf16.mxu0 0
    %887 = vmatpush1.bf16.msra.mxu0 %v485
    %888 = vmatprep.subr.bf16.mxu0 0
    %889 = vmatpush1.bf16.msra.mxu0 %v486
    %890 = vmatprep.subr.bf16.mxu0 0
    %891 = vmatpush1.bf16.msra.mxu0 %v487
    %892 = vmatprep.subr.bf16.mxu0 0
    %893 = vmatpush1.bf16.msra.mxu0 %v488
    %894 = vmatprep.subr.bf16.mxu0 0
    %895 = vmatpush1.bf16.msra.mxu0 %v489
    %896 = vmatprep.subr.bf16.mxu0 0
    %897 = vmatpush1.bf16.msra.mxu0 %v490
    %898 = vmatprep.subr.bf16.mxu0 0
    %899 = vmatpush1.bf16.msra.mxu0 %v491
    %900 = vmatprep.subr.bf16.mxu0 0
    %901 = vmatpush1.bf16.msra.mxu0 %v492
    %902 = vmatprep.subr.bf16.mxu0 0
    %903 = vmatpush1.bf16.msra.mxu0 %v493
    %904 = vmatprep.subr.bf16.mxu0 0
    %905 = vmatpush1.bf16.msra.mxu0 %v494
    %906 = vmatprep.subr.bf16.mxu0 0
    %907 = vmatpush1.bf16.msra.mxu0 %v495
    %908 = vmatprep.mubr.bf16.mxu0 %v875
    %909 = vmatmul.mubr.bf16.gmra.mrb[0].mxu0 %v874
    %v910 = vpop.f32.mrb[0].mxu0
    %v911 = vadd.f32 0.0, %v910
    %v912 = vpop.f32.mrb[0].mxu0
    %v913 = vpop.f32.mrb[0].mxu0
    %v914 = vpop.f32.mrb[0].mxu0
    %915 = vdwg.mxu0
    %v916 = vadd.f32 %v829, %v911
    %v917 = vadd.f32 %v916, %v105
    %v918 = vsel %vm287, %v265, %v917
    %v919 = vmax.f32 %v918, -1.0
    %v920 = vmin.f32 %v919, 1.0
    %v921 = vmul.f32 %v920, %v107
    %v922 = vadd.f32 %v921, %v106
    %923 = vst [vmem:[%s4] sm:$0x3] %v922
    // Predicated region
    $region26: #{policy_forward.1} parent=1 // pred_check
      _
    $region27: #{policy_forward.1} parent=1 // pred_check_branch
      %925 = sbr.rel (0) target = $region29
    $region28: #{policy_forward.1} parent=1 // pred_region
      _
    $region29: #{policy_forward.1} parent=1 // pred_fallthru
      _
    // Predicated region
    $region30: #{policy_forward.1} parent=1 // pred_check
      _
    $region31: #{policy_forward.1} parent=1 // pred_check_branch
      %927 = sbr.rel (0) target = $region33
    $region32: #{policy_forward.1} parent=1 // pred_region
      _
    $region33: #{policy_forward.1} parent=1 // pred_fallthru
      _
    %928 = vsyncpa [#allocation3], 1
    %929 = vsyncpa [#allocation5], 1

</llo_original>
